<compile_context>
chip_gen: v7x
topology: tpu7x:2x2x1
jax: 0.10.0
libtpu: 0.0.40
codegen_flags: <defaults>
</compile_context>

<pallas_src>
import functools

import jax
import jax.numpy as jnp
from jax import lax
from jax.experimental import pallas as pl
from jax.experimental.pallas import tpu as pltpu

# ---- module hyper-parameters (from __init__) --------------------------------
NUM_CLASSES = 4
EMB = 7              # embedding_dim (PyTorch)
E8 = 8               # padded embedding_dim used inside the kernel
HIDDEN = 32          # hidden_dim
CTX = 16             # context_size
KH = 3               # conv kernel height
EPS = 1e-5           # BatchNorm eps

F1 = HIDDEN * E8     # 256
F2 = CTX * E8        # 128


# ---- Pallas kernel -----------------------------------------------------------
def contextnet_kernel(cls_ref, emb_ref, w1_ref, sh1_ref, w2_ref, sh2_ref,
                      o_ref, *, seq_len):
    tm = cls_ref.shape[0]
    cls = cls_ref[...]                                        # (TM, 1) int32

    # Position within the W axis derived in-kernel (tiles hold whole batches,
    # so the pattern simply repeats every seq_len rows).
    row = lax.broadcasted_iota(jnp.int32, (tm, 1), 0)
    w_idx = row % seq_len
    has_prev = w_idx >= 1                                     # padding=1 in H
    has_next = w_idx <= seq_len - 2

    # Embedding lookup via NUM_CLASSES VPU selects (no MXU, no one-hot matmul).
    table = emb_ref[...]                                      # (4, E8) f32
    emb = jnp.where(cls == 0, table[0:1, :], 0.0)             # (TM, E8)
    for c in range(1, NUM_CLASSES):
        emb = emb + jnp.where(cls == c, table[c:c + 1, :], 0.0)

    # Conv1 (1 -> HIDDEN): haloed input is only 24 lanes wide -> one K=24 matmul.
    # "next" roll uses the positive circular shift TM-1 (pltpu.roll needs shift>=0);
    # wrapped rows are always at w==0 / w==W-1 and therefore masked.
    prev = jnp.where(has_prev, pltpu.roll(emb, shift=1, axis=0), 0.0)
    nxt = jnp.where(has_next, pltpu.roll(emb, shift=tm - 1, axis=0), 0.0)
    halo = jnp.concatenate([prev, emb, nxt], axis=-1)         # (TM, 24)
    h1 = jnp.dot(halo.astype(jnp.bfloat16), w1_ref[...],
                 preferred_element_type=jnp.float32)          # (TM, 256)
    h1 = jnp.maximum(h1 + sh1_ref[...], 0.0).astype(jnp.bfloat16)  # bf16 once

    # Conv2 (HIDDEN -> CTX): roll the matmul *outputs* instead of building a
    # (TM, 768) haloed input.  W2_cat is (256, 3*128): column block kh holds the
    # weights of conv tap kh, so y[r, kh-block] = h1[r] @ W2_tap[kh].
    y = jnp.dot(h1, w2_ref[...], preferred_element_type=jnp.float32)  # (TM, 384)
    y_prev = y[:, 0:F2]            # tap kh=0 -> contributes to the row below
    y_cur = y[:, F2:2 * F2]        # tap kh=1 -> same row
    y_next = y[:, 2 * F2:3 * F2]   # tap kh=2 -> contributes to the row above
    h2 = (jnp.where(has_prev, pltpu.roll(y_prev, shift=1, axis=0), 0.0)
          + y_cur
          + jnp.where(has_next, pltpu.roll(y_next, shift=tm - 1, axis=0), 0.0)
          + sh2_ref[...])
    o_ref[...] = jnp.maximum(h2, 0.0).astype(o_ref.dtype)     # bf16 writeback


# ---- glue: build constant matrices, call pallas ------------------------------
def build_conv_taps(w, scale_c):
    """w: (Co, Ci, KH, KW=EMB), conv padding KW//2 on the E axis.
    Returns (KH, Ci*E8, Co*E8): per-height-tap weight blocks with the BN scale
    folded in.  Row ci*E8 + q, col co*E8 + e  ->  w[co,ci,kh, q+KW//2-e] * scale[co];
    zero when the tap falls outside the kernel, zero rows/cols for the 7->8 pad."""
    Co, Ci, kh_, KW = w.shape
    q = jnp.arange(EMB)[:, None]
    e = jnp.arange(EMB)[None, :]
    kw = q + (KW // 2) - e                           # (E, E)
    valid = (kw >= 0) & (kw < KW)
    kw_c = jnp.clip(kw, 0, KW - 1)
    g = w[:, :, :, kw_c]                             # (Co, Ci, KH, q, e)
    g = jnp.where(valid[None, None, None], g, 0.0)
    g = jnp.transpose(g, (2, 1, 3, 0, 4))            # (KH, Ci, q, Co, e)
    g = jnp.pad(g, ((0, 0), (0, 0), (0, E8 - EMB), (0, 0), (0, E8 - EMB)))
    g = g * scale_c[None, None, None, :, None]       # fold BN scale per out-channel
    return g.reshape(kh_, Ci * E8, Co * E8)


def build_shift(shift_c):
    """Per-feature shift (conv bias + BN), zeroed on the padded e=7 column."""
    e_valid = (jnp.arange(E8) < EMB).astype(jnp.float32)
    return (shift_c[:, None] * e_valid[None, :]).reshape(1, -1)


def _vmem_budget():
    """Generation-aware (vmem_limit_bytes, default rows_per_tile)."""
    try:
        vmem_cap = pltpu.get_tpu_info().vmem_capacity_bytes
    except Exception:
        vmem_cap = 64 * 1024 * 1024                  # assume the small (v7x) budget
    if vmem_cap >= 96 * 1024 * 1024:                 # v5e / v6e: 128 MiB physical
        return 80 * 1024 * 1024, 4096
    return 40 * 1024 * 1024, 2048                    # v7x (64 MiB) or unknown


def contextnet_forward(x, p, rows_per_tile=None):
    """x: (B, W) int class ids.  Returns (B, CTX, W, EMB) float32 (NCHW)."""
    B, W = x.shape
    vmem_limit, tm_default = _vmem_budget()
    if rows_per_tile is None:
        rows_per_tile = tm_default

    # Row tile = whole batches (the roll-based halo relies on this invariant);
    # keep TM a multiple of 8 sublanes and aim for >=2 grid steps (v7x megacore).
    TB = max(1, min(B, max(1, rows_per_tile // W)))
    if B >= 2:
        TB = min(TB, (B + 1) // 2)
    while (TB * W) % 8 != 0:
        TB += 1
    B_pad = ((B + TB - 1) // TB) * TB
    TM = TB * W
    M_pad = B_pad * W
    num_tiles = M_pad // TM

    # Fold conv bias + eval-mode BN into per-channel scale/shift.
    scale1 = p["g1"] / jnp.sqrt(p["v1"] + EPS)
    shift1 = (p["b1"] - p["m1"]) * scale1 + p["be1"]
    scale2 = p["g2"] / jnp.sqrt(p["v2"] + EPS)
    shift2 = (p["b2"] - p["m2"]) * scale2 + p["be2"]

    taps1 = build_conv_taps(p["w1"], scale1)                         # (3, 8, 256)
    taps2 = build_conv_taps(p["w2"], scale2)                         # (3, 256, 128)
    w1 = taps1.reshape(KH * E8, F1).astype(jnp.bfloat16)             # (24, 256)  K-stacked
    w2 = jnp.transpose(taps2, (1, 0, 2)).reshape(F1, KH * F2)        # (256, 384) N-stacked
    w2 = w2.astype(jnp.bfloat16)
    sh1 = build_shift(shift1)                                        # (1, 256) f32
    sh2 = build_shift(shift2)                                        # (1, 128) f32
    emb_tab = jnp.pad(p["emb"], ((0, 0), (0, E8 - EMB))).astype(jnp.float32)

    # Per-row payload is just the class id (w-position is derived in-kernel).
    cls = jnp.pad(x.astype(jnp.int32), ((0, B_pad - B), (0, 0))).reshape(M_pad, 1)

    kernel = functools.partial(contextnet_kernel, seq_len=W)
    out = pl.pallas_call(
        kernel,
        out_shape=jax.ShapeDtypeStruct((M_pad, F2), jnp.bfloat16),
        grid=(num_tiles,),
        in_specs=[
            pl.BlockSpec((TM, 1), lambda i: (i, 0)),
            pl.BlockSpec((NUM_CLASSES, E8), lambda i: (0, 0)),
            pl.BlockSpec((KH * E8, F1), lambda i: (0, 0)),
            pl.BlockSpec((1, F1), lambda i: (0, 0)),
            pl.BlockSpec((F1, KH * F2), lambda i: (0, 0)),
            pl.BlockSpec((1, F2), lambda i: (0, 0)),
        ],
        out_specs=pl.BlockSpec((TM, F2), lambda i: (i, 0)),
        compiler_params=pltpu.CompilerParams(
            dimension_semantics=("parallel",),
            vmem_limit_bytes=vmem_limit),
    )(cls, emb_tab, w1, sh1, w2, sh2)

    out = out.reshape(B_pad, W, CTX, E8)[:B]
    # The final (B,W,C,E)->(B,C,W,E) permutation and E8->7 slice stay in XLA (in
    # bf16) so the kernel's stores remain 128-lane-dense; cast to f32 at the end.
    return out.transpose(0, 2, 1, 3)[..., :EMB].astype(jnp.float32)


# ---- deterministic parameter init (matches __init__ shapes) ------------------
def init_params(key):
    ks = jax.random.split(key, 5)
    emb = jax.random.normal(ks[0], (NUM_CLASSES, EMB), jnp.float32)
    bnd1 = 1.0 / jnp.sqrt(1.0 * KH * EMB)
    w1 = jax.random.uniform(ks[1], (HIDDEN, 1, KH, EMB), jnp.float32, -bnd1, bnd1)
    b1 = jax.random.uniform(ks[2], (HIDDEN,), jnp.float32, -bnd1, bnd1)
    bnd2 = 1.0 / jnp.sqrt(1.0 * HIDDEN * KH * EMB)
    w2 = jax.random.uniform(ks[3], (CTX, HIDDEN, KH, EMB), jnp.float32, -bnd2, bnd2)
    b2 = jax.random.uniform(ks[4], (CTX,), jnp.float32, -bnd2, bnd2)
    return {
        "emb": emb,
        "w1": w1, "b1": b1,
        "g1": jnp.ones((HIDDEN,)), "be1": jnp.zeros((HIDDEN,)),
        "m1": jnp.zeros((HIDDEN,)), "v1": jnp.ones((HIDDEN,)),
        "w2": w2, "b2": b2,
        "g2": jnp.ones((CTX,)), "be2": jnp.zeros((CTX,)),
        "m2": jnp.zeros((CTX,)), "v2": jnp.ones((CTX,)),
    }


# ---- pure-JAX reference for validation ---------------------------------------
def reference_forward(x, p):
    emb = p["emb"][x]                               # (B, W, E)
    h = emb[:, None, :, :]                          # (B, 1, W, E)  NCHW

    def conv_bn_relu(h, w, b, g, be, m, v):
        out = lax.conv_general_dilated(
            h, w, (1, 1), ((1, 1), (EMB // 2, EMB // 2)),
            dimension_numbers=("NCHW", "OIHW", "NCHW"))
        out = out + b[None, :, None, None]
        out = ((out - m[None, :, None, None]) / jnp.sqrt(v + EPS)[None, :, None, None]
               * g[None, :, None, None] + be[None, :, None, None])
        return jnp.maximum(out, 0.0)

    h = conv_bn_relu(h, p["w1"], p["b1"], p["g1"], p["be1"], p["m1"], p["v1"])
    h = conv_bn_relu(h, p["w2"], p["b2"], p["g2"], p["be2"], p["m2"], p["v2"])
    return h                                        # (B, CTX, W, E)


if __name__ == "__main__":
    key = jax.random.PRNGKey(0)
    kx, kp, kx2 = jax.random.split(key, 3)
    params = init_params(kp)

    # Small shape implied by the module: (B, W) int class ids.
    B, W = 2, 8
    x = jax.random.randint(kx, (B, W), 0, NUM_CLASSES, dtype=jnp.int32)
    out = jax.block_until_ready(contextnet_forward(x, params))
    ref = reference_forward(x, params)
    assert out.shape == (B, CTX, W, EMB), out.shape
    assert float(jnp.max(jnp.abs(out - ref))) < 5e-2

    # Multi-tile path (grid > 1, batch padding) to exercise pipelining and masks.
    B2, W2 = 5, 8
    x2 = jax.random.randint(kx2, (B2, W2), 0, NUM_CLASSES, dtype=jnp.int32)
    out2 = jax.block_until_ready(contextnet_forward(x2, params, rows_per_tile=16))
    ref2 = reference_forward(x2, params)
    assert out2.shape == (B2, CTX, W2, EMB), out2.shape
    assert float(jnp.max(jnp.abs(out2 - ref2))) < 5e-2

    print("KERNEL_OK")
</pallas_src>

<mosaic_0001>
module attributes {stable_mosaic.version = 11 : i64} {
  func.func @contextnet_kernel(%arg0: i32, %arg1: memref<8x1xi32, #tpu.memory_space<vmem>>, %arg2: memref<4x8xf32, #tpu.memory_space<vmem>>, %arg3: memref<24x256xbf16, #tpu.memory_space<vmem>>, %arg4: memref<1x256xf32, #tpu.memory_space<vmem>>, %arg5: memref<256x384xbf16, #tpu.memory_space<vmem>>, %arg6: memref<1x128xf32, #tpu.memory_space<vmem>>, %arg7: memref<8x128xbf16, #tpu.memory_space<vmem>>) attributes {dimension_semantics = [#tpu.dimension_semantics<parallel>], iteration_bounds = array<i64: 2>, scalar_prefetch = 0 : i64, scratch_operands = 0 : i64, tpu.core_type = #tpu.core_type<tc>, window_params = [{transform_indices = @transform_0, window_bounds = array<i64: 8, 1>}, {pipeline_mode = #tpu.pipeline_mode<synchronous>, transform_indices = @transform_1, window_bounds = array<i64: 4, 8>}, {pipeline_mode = #tpu.pipeline_mode<synchronous>, transform_indices = @transform_2, window_bounds = array<i64: 24, 256>}, {pipeline_mode = #tpu.pipeline_mode<synchronous>, transform_indices = @transform_3, window_bounds = array<i64: 1, 256>}, {pipeline_mode = #tpu.pipeline_mode<synchronous>, transform_indices = @transform_4, window_bounds = array<i64: 256, 384>}, {pipeline_mode = #tpu.pipeline_mode<synchronous>, transform_indices = @transform_5, window_bounds = array<i64: 1, 128>}, {transform_indices = @transform_6, window_bounds = array<i64: 8, 128>}]} {
    %c0 = arith.constant 0 : index
    %c0_0 = arith.constant 0 : index
    %0 = vector.load %arg1[%c0, %c0_0] : memref<8x1xi32, #tpu.memory_space<vmem>>, vector<8x1xi32>
    %1 = tpu.iota {dimensions = array<i32: 0>} : vector<8x1xi32>
    %c8_i32 = arith.constant 8 : i32
    %c0_i32 = arith.constant 0 : i32
    %2 = arith.cmpi eq, %c8_i32, %c0_i32 : i32
    %c1_i32 = arith.constant 1 : i32
    %3 = arith.select %2, %c1_i32, %c8_i32 : i32
    %4 = vector.broadcast %3 : i32 to vector<8x1xi32>
    %5 = arith.remsi %1, %4 : vector<8x1xi32>
    %c0_i32_1 = arith.constant 0 : i32
    %6 = vector.broadcast %c0_i32_1 : i32 to vector<8x1xi32>
    %7 = arith.cmpi ne, %5, %6 : vector<8x1xi32>
    %c0_i32_2 = arith.constant 0 : i32
    %8 = vector.broadcast %c0_i32_2 : i32 to vector<8x1xi32>
    %9 = arith.cmpi slt, %5, %8 : vector<8x1xi32>
    %c0_i32_3 = arith.constant 0 : i32
    %10 = arith.cmpi slt, %3, %c0_i32_3 : i32
    %11 = vector.broadcast %10 : i1 to vector<8x1xi1>
    %12 = vector.broadcast %11 : vector<8x1xi1> to vector<8x1xi1>
    %13 = arith.xori %9, %12 : vector<8x1xi1>
    %14 = arith.andi %13, %7 : vector<8x1xi1>
    %15 = vector.broadcast %3 : i32 to vector<8x1xi32>
    %16 = arith.addi %5, %15 : vector<8x1xi32>
    %17 = arith.select %14, %16, %5 : vector<8x1xi1>, vector<8x1xi32>
    %c1_i32_4 = arith.constant 1 : i32
    %18 = vector.broadcast %c1_i32_4 : i32 to vector<8x1xi32>
    %19 = arith.cmpi sge, %17, %18 : vector<8x1xi32>
    %c6_i32 = arith.constant 6 : i32
    %20 = vector.broadcast %c6_i32 : i32 to vector<8x1xi32>
    %21 = arith.cmpi sle, %17, %20 : vector<8x1xi32>
    %c0_5 = arith.constant 0 : index
    %c0_6 = arith.constant 0 : index
    %22 = vector.load %arg2[%c0_5, %c0_6] : memref<4x8xf32, #tpu.memory_space<vmem>>, vector<4x8xf32>
    %c0_i32_7 = arith.constant 0 : i32
    %23 = vector.broadcast %c0_i32_7 : i32 to vector<8x1xi32>
    %24 = arith.cmpi eq, %0, %23 : vector<8x1xi32>
    %25 = vector.extract_strided_slice %22 {offsets = [0, 0], sizes = [1, 8], strides = [1, 1]} : vector<4x8xf32> to vector<1x8xf32>
    %cst = arith.constant 0.000000e+00 : f32
    %26 = vector.shape_cast %24 : vector<8x1xi1> to vector<8x1xi1>
    %27 = vector.broadcast %26 : vector<8x1xi1> to vector<8x8xi1>
    %28 = vector.shape_cast %25 : vector<1x8xf32> to vector<1x8xf32>
    %29 = vector.broadcast %28 : vector<1x8xf32> to vector<8x8xf32>
    %30 = vector.broadcast %cst : f32 to vector<8x8xf32>
    %31 = arith.select %27, %29, %30 : vector<8x8xi1>, vector<8x8xf32>
    %c1_i32_8 = arith.constant 1 : i32
    %32 = vector.broadcast %c1_i32_8 : i32 to vector<8x1xi32>
    %33 = arith.cmpi eq, %0, %32 : vector<8x1xi32>
    %34 = vector.extract_strided_slice %22 {offsets = [1, 0], sizes = [1, 8], strides = [1, 1]} : vector<4x8xf32> to vector<1x8xf32>
    %cst_9 = arith.constant 0.000000e+00 : f32
    %35 = vector.shape_cast %33 : vector<8x1xi1> to vector<8x1xi1>
    %36 = vector.broadcast %35 : vector<8x1xi1> to vector<8x8xi1>
    %37 = vector.shape_cast %34 : vector<1x8xf32> to vector<1x8xf32>
    %38 = vector.broadcast %37 : vector<1x8xf32> to vector<8x8xf32>
    %39 = vector.broadcast %cst_9 : f32 to vector<8x8xf32>
    %40 = arith.select %36, %38, %39 : vector<8x8xi1>, vector<8x8xf32>
    %41 = arith.addf %31, %40 : vector<8x8xf32>
    %c2_i32 = arith.constant 2 : i32
    %42 = vector.broadcast %c2_i32 : i32 to vector<8x1xi32>
    %43 = arith.cmpi eq, %0, %42 : vector<8x1xi32>
    %44 = vector.extract_strided_slice %22 {offsets = [2, 0], sizes = [1, 8], strides = [1, 1]} : vector<4x8xf32> to vector<1x8xf32>
    %cst_10 = arith.constant 0.000000e+00 : f32
    %45 = vector.shape_cast %43 : vector<8x1xi1> to vector<8x1xi1>
    %46 = vector.broadcast %45 : vector<8x1xi1> to vector<8x8xi1>
    %47 = vector.shape_cast %44 : vector<1x8xf32> to vector<1x8xf32>
    %48 = vector.broadcast %47 : vector<1x8xf32> to vector<8x8xf32>
    %49 = vector.broadcast %cst_10 : f32 to vector<8x8xf32>
    %50 = arith.select %46, %48, %49 : vector<8x8xi1>, vector<8x8xf32>
    %51 = arith.addf %41, %50 : vector<8x8xf32>
    %c3_i32 = arith.constant 3 : i32
    %52 = vector.broadcast %c3_i32 : i32 to vector<8x1xi32>
    %53 = arith.cmpi eq, %0, %52 : vector<8x1xi32>
    %54 = vector.extract_strided_slice %22 {offsets = [3, 0], sizes = [1, 8], strides = [1, 1]} : vector<4x8xf32> to vector<1x8xf32>
    %cst_11 = arith.constant 0.000000e+00 : f32
    %55 = vector.shape_cast %53 : vector<8x1xi1> to vector<8x1xi1>
    %56 = vector.broadcast %55 : vector<8x1xi1> to vector<8x8xi1>
    %57 = vector.shape_cast %54 : vector<1x8xf32> to vector<1x8xf32>
    %58 = vector.broadcast %57 : vector<1x8xf32> to vector<8x8xf32>
    %59 = vector.broadcast %cst_11 : f32 to vector<8x8xf32>
    %60 = arith.select %56, %58, %59 : vector<8x8xi1>, vector<8x8xf32>
    %61 = arith.addf %51, %60 : vector<8x8xf32>
    %c1_i32_12 = arith.constant 1 : i32
    %62 = tpu.dynamic_rotate %61 by %c1_i32_12 dim 0 : vector<8x8xf32>, i32 -> vector<8x8xf32>
    %cst_13 = arith.constant 0.000000e+00 : f32
    %63 = vector.shape_cast %19 : vector<8x1xi1> to vector<8x1xi1>
    %64 = vector.broadcast %63 : vector<8x1xi1> to vector<8x8xi1>
    %65 = vector.broadcast %cst_13 : f32 to vector<8x8xf32>
    %66 = arith.select %64, %62, %65 : vector<8x8xi1>, vector<8x8xf32>
    %c7_i32 = arith.constant 7 : i32
    %67 = tpu.dynamic_rotate %61 by %c7_i32 dim 0 : vector<8x8xf32>, i32 -> vector<8x8xf32>
    %cst_14 = arith.constant 0.000000e+00 : f32
    %68 = vector.shape_cast %21 : vector<8x1xi1> to vector<8x1xi1>
    %69 = vector.broadcast %68 : vector<8x1xi1> to vector<8x8xi1>
    %70 = vector.broadcast %cst_14 : f32 to vector<8x8xf32>
    %71 = arith.select %69, %67, %70 : vector<8x8xi1>, vector<8x8xf32>
    %72 = tpu.concatenate %66, %61, %71 in 1 : vector<8x8xf32>, vector<8x8xf32>, vector<8x8xf32> -> vector<8x24xf32>
    %73 = arith.truncf %72 : vector<8x24xf32> to vector<8x24xbf16>
    %c0_15 = arith.constant 0 : index
    %c0_16 = arith.constant 0 : index
    %74 = vector.load %arg3[%c0_15, %c0_16] : memref<24x256xbf16, #tpu.memory_space<vmem>>, vector<24x256xbf16>
    %cst_17 = arith.constant dense<0.000000e+00> : vector<8x256xf32>
    %75 = tpu.matmul %73, %74, %cst_17 {dimension_numbers = #tpu.dot_dimension_numbers<[1], [0], [0], [1], [0, 0, 1, 1], [], []>} : vector<8x24xbf16>, vector<24x256xbf16>, vector<8x256xf32> -> vector<8x256xf32>
    %c0_18 = arith.constant 0 : index
    %c0_19 = arith.constant 0 : index
    %76 = vector.load %arg4[%c0_18, %c0_19] : memref<1x256xf32, #tpu.memory_space<vmem>>, vector<1x256xf32>
    %77 = vector.broadcast %76 : vector<1x256xf32> to vector<8x256xf32>
    %78 = arith.addf %75, %77 : vector<8x256xf32>
    %cst_20 = arith.constant 0.000000e+00 : f32
    %79 = vector.broadcast %cst_20 : f32 to vector<8x256xf32>
    %80 = arith.maximumf %78, %79 : vector<8x256xf32>
    %81 = arith.truncf %80 : vector<8x256xf32> to vector<8x256xbf16>
    %c0_21 = arith.constant 0 : index
    %c0_22 = arith.constant 0 : index
    %82 = vector.load %arg5[%c0_21, %c0_22] : memref<256x384xbf16, #tpu.memory_space<vmem>>, vector<256x384xbf16>
    %cst_23 = arith.constant dense<0.000000e+00> : vector<8x384xf32>
    %83 = tpu.matmul %81, %82, %cst_23 {dimension_numbers = #tpu.dot_dimension_numbers<[1], [0], [0], [1], [0, 0, 1, 1], [], []>} : vector<8x256xbf16>, vector<256x384xbf16>, vector<8x384xf32> -> vector<8x384xf32>
    %84 = vector.extract_strided_slice %83 {offsets = [0, 0], sizes = [8, 128], strides = [1, 1]} : vector<8x384xf32> to vector<8x128xf32>
    %85 = vector.extract_strided_slice %83 {offsets = [0, 128], sizes = [8, 128], strides = [1, 1]} : vector<8x384xf32> to vector<8x128xf32>
    %86 = vector.extract_strided_slice %83 {offsets = [0, 256], sizes = [8, 128], strides = [1, 1]} : vector<8x384xf32> to vector<8x128xf32>
    %c1_i32_24 = arith.constant 1 : i32
    %87 = tpu.dynamic_rotate %84 by %c1_i32_24 dim 0 : vector<8x128xf32>, i32 -> vector<8x128xf32>
    %cst_25 = arith.constant 0.000000e+00 : f32
    %88 = vector.shape_cast %19 : vector<8x1xi1> to vector<8x1xi1>
    %89 = vector.broadcast %88 : vector<8x1xi1> to vector<8x128xi1>
    %90 = vector.broadcast %cst_25 : f32 to vector<8x128xf32>
    %91 = arith.select %89, %87, %90 : vector<8x128xi1>, vector<8x128xf32>
    %92 = arith.addf %91, %85 : vector<8x128xf32>
    %c7_i32_26 = arith.constant 7 : i32
    %93 = tpu.dynamic_rotate %86 by %c7_i32_26 dim 0 : vector<8x128xf32>, i32 -> vector<8x128xf32>
    %cst_27 = arith.constant 0.000000e+00 : f32
    %94 = vector.shape_cast %21 : vector<8x1xi1> to vector<8x1xi1>
    %95 = vector.broadcast %94 : vector<8x1xi1> to vector<8x128xi1>
    %96 = vector.broadcast %cst_27 : f32 to vector<8x128xf32>
    %97 = arith.select %95, %93, %96 : vector<8x128xi1>, vector<8x128xf32>
    %98 = arith.addf %92, %97 : vector<8x128xf32>
    %c0_28 = arith.constant 0 : index
    %c0_29 = arith.constant 0 : index
    %99 = vector.load %arg6[%c0_28, %c0_29] : memref<1x128xf32, #tpu.memory_space<vmem>>, vector<1x128xf32>
    %100 = vector.broadcast %99 : vector<1x128xf32> to vector<8x128xf32>
    %101 = arith.addf %98, %100 : vector<8x128xf32>
    %cst_30 = arith.constant 0.000000e+00 : f32
    %102 = vector.broadcast %cst_30 : f32 to vector<8x128xf32>
    %103 = arith.maximumf %101, %102 : vector<8x128xf32>
    %104 = arith.truncf %103 : vector<8x128xf32> to vector<8x128xbf16>
    %c0_31 = arith.constant 0 : index
    %c0_32 = arith.constant 0 : index
    %105 = vector.load %arg7[%c0_31, %c0_32] : memref<8x128xbf16, #tpu.memory_space<vmem>>, vector<8x128xbf16>
    tpu.vector_store %arg7[%c0_31, %c0_32], %104 {strides = array<i32>} : memref<8x128xbf16, #tpu.memory_space<vmem>>, vector<8x128xbf16>,
    return
  }
  func.func @transform_0(%arg0: i32) -> (i32, i32) {
    %c0_i32 = arith.constant 0 : i32
    %c0_i32_0 = arith.constant 0 : i32
    return %arg0, %c0_i32 : i32, i32
  }
  func.func @transform_1(%arg0: i32) -> (i32, i32) {
    %c0_i32 = arith.constant 0 : i32
    %c0_i32_0 = arith.constant 0 : i32
    %c0_i32_1 = arith.constant 0 : i32
    return %c0_i32, %c0_i32_0 : i32, i32
  }
  func.func @transform_2(%arg0: i32) -> (i32, i32) {
    %c0_i32 = arith.constant 0 : i32
    %c0_i32_0 = arith.constant 0 : i32
    %c0_i32_1 = arith.constant 0 : i32
    return %c0_i32, %c0_i32_0 : i32, i32
  }
  func.func @transform_3(%arg0: i32) -> (i32, i32) {
    %c0_i32 = arith.constant 0 : i32
    %c0_i32_0 = arith.constant 0 : i32
    %c0_i32_1 = arith.constant 0 : i32
    return %c0_i32, %c0_i32_0 : i32, i32
  }
  func.func @transform_4(%arg0: i32) -> (i32, i32) {
    %c0_i32 = arith.constant 0 : i32
    %c0_i32_0 = arith.constant 0 : i32
    %c0_i32_1 = arith.constant 0 : i32
    return %c0_i32, %c0_i32_0 : i32, i32
  }
  func.func @transform_5(%arg0: i32) -> (i32, i32) {
    %c0_i32 = arith.constant 0 : i32
    %c0_i32_0 = arith.constant 0 : i32
    %c0_i32_1 = arith.constant 0 : i32
    return %c0_i32, %c0_i32_0 : i32, i32
  }
  func.func @transform_6(%arg0: i32) -> (i32, i32) {
    %c0_i32 = arith.constant 0 : i32
    %c0_i32_0 = arith.constant 0 : i32
    return %arg0, %c0_i32 : i32, i32
  }
}

</mosaic_0001>

<llo_original>
// kernel: tpu_custom_call.1
$region0: #{tpu_custom_call.1}
  #allocation0 [shape = 'u32[]', space=smem, size = 0x4, offset = 0x4, fixed_abs, tag = 'smem constant byte address 0x4 - core index']
  #allocation1 [shape = 'u32[144,128]{1,0:T(1,128)}', space=vmem, size = 0x12000, scoped, tag = 'internal scratch']
  %s0 = inlined_call_operand.vmem [shape: s32[16,1], index: 0, kind: input, shape index: {}]
  %s1 = inlined_call_operand.hbm [shape: f32[4,8], index: 1, kind: input, shape index: {}]
  %s2 = inlined_call_operand.vmem [shape: bf16[24,256], index: 2, kind: input, shape index: {}]
  %s3 = inlined_call_operand.vmem [shape: f32[1,256], index: 3, kind: input, shape index: {}]
  %s4 = inlined_call_operand.hbm [shape: bf16[256,384], index: 4, kind: input, shape index: {}]
  %s5 = inlined_call_operand.vmem [shape: f32[1,128], index: 5, kind: input, shape index: {}]
  %s6 = inlined_call_operand.hbm [shape: bf16[16,128], index: 6, kind: output, shape index: {}]
  %s7 = sld [smem:[#allocation0]]
  $region65: #{tpu_custom_call.1} parent=0
    _
  %s9 = ssub.s32 1, %s7
  %s10 = scalar_select 0, %s9, %s7
  $region1: #{tpu_custom_call.1} parent=0
    #allocation2 [shape = 'u8[2048]{0}', space=vmem, size = 0x800, scoped, tag = 'input window, operand 1, single buffered']
    #allocation3 [shape = 's32[2]{0}', space=sflag, size = 0x8, scoped, tag = 'scoped memory for tpu_custom_call.1']
    #allocation4 [shape = 's32[2]{0}', space=sflag, size = 0x8, scoped, tag = 'scoped memory for tpu_custom_call.1']
    #allocation5 [shape = 'u8[196608]{0}', space=vmem, size = 0x30000, scoped, tag = 'input window, operand 4, single buffered']
    #allocation6 [shape = 's32[1]{0}', space=sflag, size = 0x4, scoped, tag = 'scoped memory for tpu_custom_call.1']
    #allocation7 [shape = 'u8[4096]{0}', space=vmem, size = 0x1000, scoped, tag = 'output window, operand 0']
    %11 = vsyncpa [#allocation3], 0
    %12 = vsyncpa [#allocation6], 0
    %13 = vsyncpa [#allocation4], 0
    %s14 = scalar_lea.sflag [#allocation4], 1
    %15 = vsyncpa %s14, 0
    loop: start=0, step=1, limit=4
    $region2: #{tpu_custom_call.1} parent=1 // loop_pre_header
      _
    $region3: #{tpu_custom_call.1} parent=1 // loop_header
      %s17 = sphi 0, %s21
      %p18 = scmp.ge.s32.totalorder %s17, 4
      %s27 = sphi 0, %s29
      %s30 = sphi 0, %s27
      %s31 = sphi 0, %s30
      %s47 = sphi 0, %s31
      %s51 = sphi 0, %s51
      %s53 = sphi 0, %s51
      %s54 = sphi 0, %s53
      %s68 = sphi 0, %s54
      %s72 = sphi 0, %s72
      %s74 = sphi 0, %s72
      %s75 = sphi 0, %s74
      %s89 = sphi 0, %s75
      %s93 = sphi 0, %s93
      %s95 = sphi 0, %s93
      %s96 = sphi 0, %s95
      %s110 = sphi 0, %s96
      %s114 = sphi 0, %s114
      %s116 = sphi 0, %s114
      %s117 = sphi 0, %s116
      %s131 = sphi 0, %s117
      %s135 = sphi 0, %s135
      %s137 = sphi 0, %s135
      %s138 = sphi 0, %s137
      %s152 = sphi 0, %s138
      %s158 = sphi 0, %s160
      %s161 = sphi 0, %s158
      %s162 = sphi 0, %s161
      %s178 = sphi 0, %s162
    $region4: #{tpu_custom_call.1} parent=1 // loop_header_branch
      %20 = sbr.rel (%p18) target = $region8
    $region5: #{tpu_custom_call.1} parent=1 // loop_body
      %s22 = ssub.s32 %s17, 1
      %s23 = ssub.s32 %s17, 2
      %s24 = sadd.s32 %s17, 1
      %s25 = ssub.s32 %s17, %s24
      %p26 = scmp.eq.s32.totalorder %s25, 0
      %s28 = sadd.s32 %s27, 1
      %s29 = scalar_select %p26, %s27, %s28
      %p32 = pneg %p26
      %p33 = scmp.eq.s32.totalorder %s17, 1
      %p34 = por %p32, %p33
      %p35 = scmp.ne.s32.totalorder %s27, %s30
      %p36 = scmp.eq.s32.totalorder %s17, 0
      %p37 = por %p35, %p36
      %p38 = scmp.ne.s32.totalorder %s27, %s30
      %p39 = scmp.eq.s32.totalorder %s22, 1
      %p40 = por %p38, %p39
      %p41 = scmp.ne.s32.totalorder %s30, %s31
      %p42 = scmp.eq.s32.totalorder %s22, 0
      %p43 = por %p41, %p42
      %p44 = scmp.ne.s32.totalorder %s30, %s31
      %p45 = scmp.eq.s32.totalorder %s23, 1
      %p46 = por %p44, %p45
      %p48 = scmp.ne.s32.totalorder %s31, %s47
      %p49 = scmp.eq.s32.totalorder %s23, 0
      %p50 = por %p48, %p49
      %s52 = sadd.s32 %s51, 1
      %p55 = scmp.eq.s32.totalorder %s17, 1
      %p56 = scmp.ne.s32.totalorder %s51, %s53
      %p57 = scmp.eq.s32.totalorder %s17, 0
      %p58 = por %p56, %p57
      %p59 = scmp.ne.s32.totalorder %s51, %s53
      %p60 = scmp.eq.s32.totalorder %s22, 1
      %p61 = por %p59, %p60
      %p62 = scmp.ne.s32.totalorder %s53, %s54
      %p63 = scmp.eq.s32.totalorder %s22, 0
      %p64 = por %p62, %p63
      %p65 = scmp.ne.s32.totalorder %s53, %s54
      %p66 = scmp.eq.s32.totalorder %s23, 1
      %p67 = por %p65, %p66
      %p69 = scmp.ne.s32.totalorder %s54, %s68
      %p70 = scmp.eq.s32.totalorder %s23, 0
      %p71 = por %p69, %p70
      %s73 = sadd.s32 %s72, 1
      %p76 = scmp.eq.s32.totalorder %s17, 1
      %p77 = scmp.ne.s32.totalorder %s72, %s74
      %p78 = scmp.eq.s32.totalorder %s17, 0
      %p79 = por %p77, %p78
      %p80 = scmp.ne.s32.totalorder %s72, %s74
      %p81 = scmp.eq.s32.totalorder %s22, 1
      %p82 = por %p80, %p81
      %p83 = scmp.ne.s32.totalorder %s74, %s75
      %p84 = scmp.eq.s32.totalorder %s22, 0
      %p85 = por %p83, %p84
      %p86 = scmp.ne.s32.totalorder %s74, %s75
      %p87 = scmp.eq.s32.totalorder %s23, 1
      %p88 = por %p86, %p87
      %p90 = scmp.ne.s32.totalorder %s75, %s89
      %p91 = scmp.eq.s32.totalorder %s23, 0
      %p92 = por %p90, %p91
      %s94 = sadd.s32 %s93, 1
      %p97 = scmp.eq.s32.totalorder %s17, 1
      %p98 = scmp.ne.s32.totalorder %s93, %s95
      %p99 = scmp.eq.s32.totalorder %s17, 0
      %p100 = por %p98, %p99
      %p101 = scmp.ne.s32.totalorder %s93, %s95
      %p102 = scmp.eq.s32.totalorder %s22, 1
      %p103 = por %p101, %p102
      %p104 = scmp.ne.s32.totalorder %s95, %s96
      %p105 = scmp.eq.s32.totalorder %s22, 0
      %p106 = por %p104, %p105
      %p107 = scmp.ne.s32.totalorder %s95, %s96
      %p108 = scmp.eq.s32.totalorder %s23, 1
      %p109 = por %p107, %p108
      %p111 = scmp.ne.s32.totalorder %s96, %s110
      %p112 = scmp.eq.s32.totalorder %s23, 0
      %p113 = por %p111, %p112
      %s115 = sadd.s32 %s114, 1
      %p118 = scmp.eq.s32.totalorder %s17, 1
      %p119 = scmp.ne.s32.totalorder %s114, %s116
      %p120 = scmp.eq.s32.totalorder %s17, 0
      %p121 = por %p119, %p120
      %p122 = scmp.ne.s32.totalorder %s114, %s116
      %p123 = scmp.eq.s32.totalorder %s22, 1
      %p124 = por %p122, %p123
      %p125 = scmp.ne.s32.totalorder %s116, %s117
      %p126 = scmp.eq.s32.totalorder %s22, 0
      %p127 = por %p125, %p126
      %p128 = scmp.ne.s32.totalorder %s116, %s117
      %p129 = scmp.eq.s32.totalorder %s23, 1
      %p130 = por %p128, %p129
      %p132 = scmp.ne.s32.totalorder %s117, %s131
      %p133 = scmp.eq.s32.totalorder %s23, 0
      %p134 = por %p132, %p133
      %s136 = sadd.s32 %s135, 1
      %p139 = scmp.eq.s32.totalorder %s17, 1
      %p140 = scmp.ne.s32.totalorder %s135, %s137
      %p141 = scmp.eq.s32.totalorder %s17, 0
      %p142 = por %p140, %p141
      %p143 = scmp.ne.s32.totalorder %s135, %s137
      %p144 = scmp.eq.s32.totalorder %s22, 1
      %p145 = por %p143, %p144
      %p146 = scmp.ne.s32.totalorder %s137, %s138
      %p147 = scmp.eq.s32.totalorder %s22, 0
      %p148 = por %p146, %p147
      %p149 = scmp.ne.s32.totalorder %s137, %s138
      %p150 = scmp.eq.s32.totalorder %s23, 1
      %p151 = por %p149, %p150
      %p153 = scmp.ne.s32.totalorder %s138, %s152
      %p154 = scmp.eq.s32.totalorder %s23, 0
      %p155 = por %p153, %p154
      %s156 = ssub.s32 %s17, %s24
      %p157 = scmp.eq.s32.totalorder %s156, 0
      %s159 = sadd.s32 %s158, 1
      %s160 = scalar_select %p157, %s158, %s159
      %p163 = pneg %p157
      %p164 = scmp.eq.s32.totalorder %s17, 1
      %p165 = por %p163, %p164
      %p166 = scmp.ne.s32.totalorder %s158, %s161
      %p167 = scmp.eq.s32.totalorder %s17, 0
      %p168 = por %p166, %p167
      %p169 = scmp.ne.s32.totalorder %s158, %s161
      %p170 = scmp.eq.s32.totalorder %s22, 1
      %p171 = por %p169, %p170
      %p172 = scmp.ne.s32.totalorder %s161, %s162
      %p173 = scmp.eq.s32.totalorder %s22, 0
      %p174 = por %p172, %p173
      %p175 = scmp.ne.s32.totalorder %s161, %s162
      %p176 = scmp.eq.s32.totalorder %s23, 1
      %p177 = por %p175, %p176
      %p179 = scmp.ne.s32.totalorder %s162, %s178
      %p180 = scmp.eq.s32.totalorder %s23, 0
      %p181 = por %p179, %p180
      %p182 = scmp.le.s32.totalorder 1, %s17
      %p183 = scmp.lt.s32.totalorder %s17, 3
      %p184 = pnand %p182, %p183
      %p185 = pneg %p184
      // Predicated region
      $region9: #{tpu_custom_call.1} parent=5 // pred_check
        _
      $region10: #{tpu_custom_call.1} parent=5 // pred_check_branch
        %187 = sbr.rel (%p184) target = $region12
      $region11: #{tpu_custom_call.1} parent=5 // pred_region
        %s188 = ssub.s32 %s17, 1
        // Predicated region
        $region13: #{tpu_custom_call.1} parent=11 // pred_check
          %p189 = pneg %p64
        $region14: #{tpu_custom_call.1} parent=11 // pred_check_branch
          %191 = sbr.rel (%p189) target = $region16
        $region15: #{tpu_custom_call.1} parent=11 // pred_region
          %s193 = ssub.s32 64, 64
          %194 = vsyncadd [#allocation3], %s193
          %s196 = sshll.u32 [#allocation2], 4
          %s197 = int_to_ptr.vmem [resolvable:$true] %s196
          %199 = dma.hbm_to_vmem [thread:$0]  %s1, 64, %s197, [#allocation3]
        $region16: #{tpu_custom_call.1} parent=11 // pred_fallthru
          _
        // Predicated region
        $region17: #{tpu_custom_call.1} parent=11 // pred_check
          %p200 = pneg %p85
        $region18: #{tpu_custom_call.1} parent=11 // pred_check_branch
          %202 = sbr.rel (%p200) target = $region20
        $region19: #{tpu_custom_call.1} parent=11 // pred_region
          _
        $region20: #{tpu_custom_call.1} parent=11 // pred_fallthru
          _
        // Predicated region
        $region21: #{tpu_custom_call.1} parent=11 // pred_check
          %p203 = pneg %p106
        $region22: #{tpu_custom_call.1} parent=11 // pred_check_branch
          %205 = sbr.rel (%p203) target = $region24
        $region23: #{tpu_custom_call.1} parent=11 // pred_region
          _
        $region24: #{tpu_custom_call.1} parent=11 // pred_fallthru
          _
        // Predicated region
        $region25: #{tpu_custom_call.1} parent=11 // pred_check
          %p206 = pneg %p127
        $region26: #{tpu_custom_call.1} parent=11 // pred_check_branch
          %208 = sbr.rel (%p206) target = $region28
        $region27: #{tpu_custom_call.1} parent=11 // pred_region
          %s210 = ssub.s32 6144, 6144
          %211 = vsyncadd [#allocation6], %s210
          %s212 = sshll.u32 [#allocation5], 4
          %s213 = int_to_ptr.vmem [resolvable:$true] %s212
          %218 = dma.hbm_to_vmem [thread:$0]  %s4, 6144, %s213, [#allocation6], 192, 192, 12
        $region28: #{tpu_custom_call.1} parent=11 // pred_fallthru
          _
        // Predicated region
        $region29: #{tpu_custom_call.1} parent=11 // pred_check
          %p219 = pneg %p148
        $region30: #{tpu_custom_call.1} parent=11 // pred_check_branch
          %221 = sbr.rel (%p219) target = $region32
        $region31: #{tpu_custom_call.1} parent=11 // pred_region
          _
        $region32: #{tpu_custom_call.1} parent=11 // pred_fallthru
          _
      $region12: #{tpu_custom_call.1} parent=5 // pred_fallthru
        _
      %p222 = scmp.lt.s32.totalorder %s17, 2
      // Predicated region
      $region33: #{tpu_custom_call.1} parent=5 // pred_check
        %p223 = pneg %p222
      $region34: #{tpu_custom_call.1} parent=5 // pred_check_branch
        %225 = sbr.rel (%p223) target = $region36
      $region35: #{tpu_custom_call.1} parent=5 // pred_region
        // Predicated region
        $region37: #{tpu_custom_call.1} parent=35 // pred_check
          %p226 = pneg %p37
        $region38: #{tpu_custom_call.1} parent=35 // pred_check_branch
          %228 = sbr.rel (%p226) target = $region40
        $region39: #{tpu_custom_call.1} parent=35 // pred_region
          %p229 = scmp.lt.s32.totalorder %s17, 1
          %s230 = scalar_select %p229, %s17, 1
          %s231 = smul.addr %s230, 8
          %s232 = scalar_lea.vmem %s0, %s231
        $region40: #{tpu_custom_call.1} parent=35 // pred_fallthru
          _
      $region36: #{tpu_custom_call.1} parent=5 // pred_fallthru
        _
      %p233 = scmp.le.s32.totalorder 1, %s17
      %p234 = scmp.lt.s32.totalorder %s17, 3
      %p235 = pnand %p233, %p234
      %p236 = pneg %p235
      // Predicated region
      $region41: #{tpu_custom_call.1} parent=5 // pred_check
        _
      $region42: #{tpu_custom_call.1} parent=5 // pred_check_branch
        %238 = sbr.rel (%p235) target = $region44
      $region43: #{tpu_custom_call.1} parent=5 // pred_region
        %s239 = ssub.s32 %s17, 1
        // Predicated region
        $region45: #{tpu_custom_call.1} parent=43 // pred_check
          %p240 = pneg %p64
        $region46: #{tpu_custom_call.1} parent=43 // pred_check_branch
          %242 = sbr.rel (%p240) target = $region48
        $region47: #{tpu_custom_call.1} parent=43 // pred_region
          %243 = dma.done [#allocation3], 64
        $region48: #{tpu_custom_call.1} parent=43 // pred_fallthru
          _
        // Predicated region
        $region49: #{tpu_custom_call.1} parent=43 // pred_check
          %p244 = pneg %p127
        $region50: #{tpu_custom_call.1} parent=43 // pred_check_branch
          %246 = sbr.rel (%p244) target = $region52
        $region51: #{tpu_custom_call.1} parent=43 // pred_region
          %247 = dma.done [#allocation6], 6144
        $region52: #{tpu_custom_call.1} parent=43 // pred_fallthru
          _
        %p248 = scmp.lt.s32.totalorder %s22, 1
        %s249 = scalar_select %p248, %s22, 1
        %s250 = smul.addr %s249, 8
        %s251 = scalar_lea.vmem %s0, %s250
        %p252 = pneg %p43
        %p253 = pneg %p40
        %p254 = pneg %p64
        %p255 = pneg %p61
        %p256 = pneg %p85
        %p257 = pneg %p82
        %p258 = pneg %p106
        %p259 = pneg %p103
        %p260 = pneg %p127
        %p261 = pneg %p124
        %p262 = pneg %p148
        %p263 = pneg %p145
        %p264 = pneg %p174
        %p265 = pneg %p171
        %s266 = sand.u32 %s161, 1
        %s267 = scalar_lea.sflag [#allocation4], %s266
        %s268 = sand.u32 %s161, 1
        %s269 = smul.addr %s268, 4
        %s270 = scalar_lea.vmem [#allocation7], %s269
        %p271 = scmp.lt.s32.totalorder %s22, 1
        %s272 = scalar_select %p271, %s22, 1
        %s273 = smul.addr %s272, 8
        %s274 = scalar_lea.vmem %s0, %s273
        %v276 = vld [vmem:[%s274] sm:$0xff]
        %v277 = vlaneseq
        %v278 = vshrl.u32 %v277, 7
        %vm279 = vcmp.lt.s32.totalorder %v278, 0
        %v280 = vsub.s32 0, %v278
        %v281 = vsel %vm279, %v280, %v278
        %v282 = vshrl.u32 %v281, 3
        %v283 = vand.u32 %v281, 7
        %v284 = vsub.s32 0, %v283
        %v285 = vsel %vm279, %v284, %v283
        %vm286 = vcmp.ne.s32.totalorder %v285, 0
        %vm287 = vcmp.lt.s32.totalorder %v285, 0
        %vm288 = vmand %vm287, %vm286
        %v289 = vadd.s32 %v285, 8
        %v290 = vsel %vm288, %v289, %v285
        %vm291 = vcmp.ge.s32.totalorder %v290, 1
        %vm292 = vcmp.le.s32.totalorder %v290, 6
        %v293 = vld [vmem:[#allocation2] sm:$0xf]
        %vm294 = vcmp.eq.s32.totalorder %v276, 0
        %v295 = vsel %vm294, 1, 0
        %296 = vset.pattern.permute.xlu0 0
        %297 = vperm.xlu0 %296, %v295
        %v298 = vpop.permute.xlu0 %297
        %vm299 = vcmp.eq.s32.totalorder %v298, 1
        %v300 = vlaneseq
        %v301 = vshrl.u32 %v300, 7
        %v302 = vsub.s32 0, %v301
        %v303 = vrot.slane %v293, %v302
        %v304 = vsel %vm299, %v303, 0.0
        %vm305 = vcmp.eq.s32.totalorder %v276, 1
        %v306 = vsel %vm305, 1, 0
        %307 = vset.pattern.permute.xlu0 0
        %308 = vperm.xlu0 %307, %v306
        %v309 = vpop.permute.xlu0 %308
        %vm310 = vcmp.eq.s32.totalorder %v309, 1
        %v311 = vlaneseq
        %v312 = vshrl.u32 %v311, 7
        %v313 = vsub.s32 1, %v312
        %v314 = vrot.slane %v293, %v313
        %v315 = vsel %vm310, %v314, 0.0
        %v316 = vadd.f32 %v304, %v315
        %vm317 = vcmp.eq.s32.totalorder %v276, 2
        %v318 = vsel %vm317, 1, 0
        %319 = vset.pattern.permute.xlu0 0
        %320 = vperm.xlu0 %319, %v318
        %v321 = vpop.permute.xlu0 %320
        %vm322 = vcmp.eq.s32.totalorder %v321, 1
        %v323 = vlaneseq
        %v324 = vshrl.u32 %v323, 7
        %v325 = vsub.s32 2, %v324
        %v326 = vrot.slane %v293, %v325
        %v327 = vsel %vm322, %v326, 0.0
        %v328 = vadd.f32 %v316, %v327
        %vm329 = vcmp.eq.s32.totalorder %v276, 3
        %v330 = vsel %vm329, 1, 0
        %331 = vset.pattern.permute.xlu0 0
        %332 = vperm.xlu0 %331, %v330
        %v333 = vpop.permute.xlu0 %332
        %vm334 = vcmp.eq.s32.totalorder %v333, 1
        %v335 = vlaneseq
        %v336 = vshrl.u32 %v335, 7
        %v337 = vsub.s32 3, %v336
        %v338 = vrot.slane %v293, %v337
        %v339 = vsel %vm334, %v338, 0.0
        %v340 = vadd.f32 %v328, %v339
        %v341 = vrot.slane %v340, 7
        %v342 = vsel %vm291, 1, 0
        %vm343 = vcmp.eq.s32.totalorder %v342, 1
        %v344 = vsel %vm343, %v341, 0.0
        %v345 = vrot.slane %v340, 1
        %v346 = vsel %vm292, 1, 0
        %vm347 = vcmp.eq.s32.totalorder %v346, 1
        %v348 = vsel %vm347, %v345, 0.0
        %350 = vrot.lane.b32.xlu0 %v340, 8
        %v351 = vpop.permute.xlu0 %350
        %354 = vrot.lane.b32.xlu0 %v348, 16
        %v355 = vpop.permute.xlu0 %354
        %vm357 = vcmask 64512
        %v358 = vsel %vm357, %v344, %v351
        %vm359 = vcmask 130048
        %v360 = vsel %vm359, %v358, %v355
        %v361 = vpack.c.bf16 %v360, %v360
        %v362 = vld [vmem:[%s2] sm:$0xff]
        %v363 = vld [vmem:[%s2 + $0x8] sm:$0xff]
        %v364 = vld [vmem:[%s2 + $0x10] sm:$0xff]
        %v365 = vld [vmem:[%s3] sm:$0x3]
        %v367 = vlaneseq
        %v368 = vshrl.u32 %v367, 7
        %v369 = vsub.s32 0, %v368
        %v370 = vrot.slane %v365, %v369
        %v371 = vlaneseq
        %v372 = vshrl.u32 %v371, 7
        %v373 = vsub.s32 1, %v372
        %v374 = vrot.slane %v365, %v373
        %v380 = vunpack.c.l.b16 %v362
        %v381 = vunpack.c.h.b16 %v362
        %v382 = vunpack.c.l.b16 %v363
        %v383 = vunpack.c.h.b16 %v363
        %v384 = vunpack.c.l.b16 %v364
        %v385 = vunpack.c.h.b16 %v364
        %v386 = vpack.c.b16 %v382, %v380
        %v387 = vpack.c.b16 %v383, %v381
        %v388 = vpack.c.b16 %v384, %v384
        %v389 = vpack.c.b16 %v385, %v385
        %vm392 = vcmask 195584
        %v394 = vsel %vm392, %v361, 0
        %vm396 = vcmask 1043456
        %v398 = vsel %vm396, %v388, 0
        %v401 = vsel %vm396, %v389, 0
        %403 = vmatprep.subr.bf16.mxu0 %v387
        %404 = vmatpush1.bf16.msra.mxu0 %v386
        %405 = vmatprep.subr.bf16.mxu0 %v401
        %406 = vmatpush1.bf16.msra.mxu0 %v398
        %407 = vmatprep.subr.bf16.mxu0 0
        %408 = vmatpush1.bf16.msra.mxu0 0
        %409 = vmatprep.subr.bf16.mxu0 0
        %410 = vmatpush1.bf16.msra.mxu0 0
        %411 = vmatprep.subr.bf16.mxu0 0
        %412 = vmatpush1.bf16.msra.mxu0 0
        %413 = vmatprep.subr.bf16.mxu0 0
        %414 = vmatpush1.bf16.msra.mxu0 0
        %415 = vmatprep.subr.bf16.mxu0 0
        %416 = vmatpush1.bf16.msra.mxu0 0
        %417 = vmatprep.subr.bf16.mxu0 0
        %418 = vmatpush1.bf16.msra.mxu0 0
        %419 = vmatprep.subr.bf16.mxu0 0
        %420 = vmatpush1.bf16.msra.mxu0 0
        %421 = vmatprep.subr.bf16.mxu0 0
        %422 = vmatpush1.bf16.msra.mxu0 0
        %423 = vmatprep.subr.bf16.mxu0 0
        %424 = vmatpush1.bf16.msra.mxu0 0
        %425 = vmatprep.subr.bf16.mxu0 0
        %426 = vmatpush1.bf16.msra.mxu0 0
        %427 = vmatprep.subr.bf16.mxu0 0
        %428 = vmatpush1.bf16.msra.mxu0 0
        %429 = vmatprep.subr.bf16.mxu0 0
        %430 = vmatpush1.bf16.msra.mxu0 0
        %431 = vmatprep.subr.bf16.mxu0 0
        %432 = vmatpush1.bf16.msra.mxu0 0
        %433 = vmatprep.subr.bf16.mxu0 0
        %434 = vmatpush1.bf16.msra.mxu0 0
        %435 = vmatprep.mubr.bf16.mxu0 0
        %436 = vmatmul.mubr.bf16.gmra.mrb[0].mxu0 %v394
        %v437 = vpop.f32.mrb[0].mxu0
        %v438 = vadd.f32 %v370, %v437
        %v439 = vpop.f32.mrb[0].mxu0
        %v440 = vadd.f32 %v374, %v439
        %v441 = vpop.f32.mrb[0].mxu0
        %v442 = vpop.f32.mrb[0].mxu0
        %443 = vdwg.mxu0
        %v444 = vmax.f32 %v438, 0.0
        %v445 = vmax.f32 %v440, 0.0
        %v446 = vpack.c.bf16 %v444, %v444
        %v447 = vpack.c.bf16 %v445, %v445
        %v448 = vld [vmem:[#allocation5] sm:$0xff]
        %v449 = vld [vmem:[#allocation5 + $0x8] sm:$0xf]
        %v450 = vld [vmem:[#allocation5 + $0xc] sm:$0xff]
        %v451 = vld [vmem:[#allocation5 + $0x14] sm:$0xf]
        %v452 = vld [vmem:[#allocation5 + $0x18] sm:$0xff]
        %v453 = vld [vmem:[#allocation5 + $0x20] sm:$0xf]
        %v454 = vld [vmem:[#allocation5 + $0x24] sm:$0xff]
        %v455 = vld [vmem:[#allocation5 + $0x2c] sm:$0xf]
        %v456 = vld [vmem:[#allocation5 + $0x30] sm:$0xff]
        %v457 = vld [vmem:[#allocation5 + $0x38] sm:$0xf]
        %v458 = vld [vmem:[#allocation5 + $0x3c] sm:$0xff]
        %v459 = vld [vmem:[#allocation5 + $0x44] sm:$0xf]
        %v460 = vld [vmem:[#allocation5 + $0x48] sm:$0xff]
        %v461 = vld [vmem:[#allocation5 + $0x50] sm:$0xf]
        %v462 = vld [vmem:[#allocation5 + $0x54] sm:$0xff]
        %v463 = vld [vmem:[#allocation5 + $0x5c] sm:$0xf]
        %v464 = vld [vmem:[#allocation5 + $0x60] sm:$0xff]
        %v465 = vld [vmem:[#allocation5 + $0x68] sm:$0xf]
        %v466 = vld [vmem:[#allocation5 + $0x6c] sm:$0xff]
        %v467 = vld [vmem:[#allocation5 + $0x74] sm:$0xf]
        %v468 = vld [vmem:[#allocation5 + $0x78] sm:$0xff]
        %v469 = vld [vmem:[#allocation5 + $0x80] sm:$0xf]
        %v470 = vld [vmem:[#allocation5 + $0x84] sm:$0xff]
        %v471 = vld [vmem:[#allocation5 + $0x8c] sm:$0xf]
        %v472 = vld [vmem:[#allocation5 + $0x90] sm:$0xff]
        %v473 = vld [vmem:[#allocation5 + $0x98] sm:$0xf]
        %v474 = vld [vmem:[#allocation5 + $0x9c] sm:$0xff]
        %v475 = vld [vmem:[#allocation5 + $0xa4] sm:$0xf]
        %v476 = vld [vmem:[#allocation5 + $0xa8] sm:$0xff]
        %v477 = vld [vmem:[#allocation5 + $0xb0] sm:$0xf]
        %v478 = vld [vmem:[#allocation5 + $0xb4] sm:$0xff]
        %v479 = vld [vmem:[#allocation5 + $0xbc] sm:$0xf]
        %v480 = vld [vmem:[#allocation5 + $0xc0] sm:$0xff]
        %v481 = vld [vmem:[#allocation5 + $0xc8] sm:$0xf]
        %v482 = vld [vmem:[#allocation5 + $0xcc] sm:$0xff]
        %v483 = vld [vmem:[#allocation5 + $0xd4] sm:$0xf]
        %v484 = vld [vmem:[#allocation5 + $0xd8] sm:$0xff]
        %v485 = vld [vmem:[#allocation5 + $0xe0] sm:$0xf]
        %v486 = vld [vmem:[#allocation5 + $0xe4] sm:$0xff]
        %v487 = vld [vmem:[#allocation5 + $0xec] sm:$0xf]
        %v488 = vld [vmem:[#allocation5 + $0xf0] sm:$0xff]
        %v489 = vld [vmem:[#allocation5 + $0xf8] sm:$0xf]
        %v490 = vld [vmem:[#allocation5 + $0xfc] sm:$0xff]
        %v491 = vld [vmem:[#allocation5 + $0x104] sm:$0xf]
        %v492 = vld [vmem:[#allocation5 + $0x108] sm:$0xff]
        %v493 = vld [vmem:[#allocation5 + $0x110] sm:$0xf]
        %v494 = vld [vmem:[#allocation5 + $0x114] sm:$0xff]
        %v495 = vld [vmem:[#allocation5 + $0x11c] sm:$0xf]
        %v496 = vld [vmem:[#allocation5 + $0x120] sm:$0xff]
        %v497 = vld [vmem:[#allocation5 + $0x128] sm:$0xf]
        %v498 = vld [vmem:[#allocation5 + $0x12c] sm:$0xff]
        %v499 = vld [vmem:[#allocation5 + $0x134] sm:$0xf]
        %v500 = vld [vmem:[#allocation5 + $0x138] sm:$0xff]
        %v501 = vld [vmem:[#allocation5 + $0x140] sm:$0xf]
        %v502 = vld [vmem:[#allocation5 + $0x144] sm:$0xff]
        %v503 = vld [vmem:[#allocation5 + $0x14c] sm:$0xf]
        %v504 = vld [vmem:[#allocation5 + $0x150] sm:$0xff]
        %v505 = vld [vmem:[#allocation5 + $0x158] sm:$0xf]
        %v506 = vld [vmem:[#allocation5 + $0x15c] sm:$0xff]
        %v507 = vld [vmem:[#allocation5 + $0x164] sm:$0xf]
        %v508 = vld [vmem:[#allocation5 + $0x168] sm:$0xff]
        %v509 = vld [vmem:[#allocation5 + $0x170] sm:$0xf]
        %v510 = vld [vmem:[#allocation5 + $0x174] sm:$0xff]
        %v511 = vld [vmem:[#allocation5 + $0x17c] sm:$0xf]
        %v576 = vunpack.c.l.b16 %v448
        %v577 = vunpack.c.h.b16 %v448
        %v578 = vunpack.c.l.b16 %v449
        %v579 = vunpack.c.l.b16 %v450
        %v580 = vunpack.c.h.b16 %v450
        %v581 = vunpack.c.l.b16 %v451
        %v582 = vunpack.c.l.b16 %v452
        %v583 = vunpack.c.h.b16 %v452
        %v584 = vunpack.c.l.b16 %v453
        %v585 = vunpack.c.l.b16 %v454
        %v586 = vunpack.c.h.b16 %v454
        %v587 = vunpack.c.l.b16 %v455
        %v588 = vunpack.c.l.b16 %v456
        %v589 = vunpack.c.h.b16 %v456
        %v590 = vunpack.c.l.b16 %v457
        %v591 = vunpack.c.l.b16 %v458
        %v592 = vunpack.c.h.b16 %v458
        %v593 = vunpack.c.l.b16 %v459
        %v594 = vunpack.c.l.b16 %v460
        %v595 = vunpack.c.h.b16 %v460
        %v596 = vunpack.c.l.b16 %v461
        %v597 = vunpack.c.l.b16 %v462
        %v598 = vunpack.c.h.b16 %v462
        %v599 = vunpack.c.l.b16 %v463
        %v600 = vunpack.c.l.b16 %v464
        %v601 = vunpack.c.h.b16 %v464
        %v602 = vunpack.c.l.b16 %v465
        %v603 = vunpack.c.l.b16 %v466
        %v604 = vunpack.c.h.b16 %v466
        %v605 = vunpack.c.l.b16 %v467
        %v606 = vunpack.c.l.b16 %v468
        %v607 = vunpack.c.h.b16 %v468
        %v608 = vunpack.c.l.b16 %v469
        %v609 = vunpack.c.l.b16 %v470
        %v610 = vunpack.c.h.b16 %v470
        %v611 = vunpack.c.l.b16 %v471
        %v612 = vunpack.c.l.b16 %v472
        %v613 = vunpack.c.h.b16 %v472
        %v614 = vunpack.c.l.b16 %v473
        %v615 = vunpack.c.l.b16 %v474
        %v616 = vunpack.c.h.b16 %v474
        %v617 = vunpack.c.l.b16 %v475
        %v618 = vunpack.c.l.b16 %v476
        %v619 = vunpack.c.h.b16 %v476
        %v620 = vunpack.c.l.b16 %v477
        %v621 = vunpack.c.l.b16 %v478
        %v622 = vunpack.c.h.b16 %v478
        %v623 = vunpack.c.l.b16 %v479
        %v624 = vunpack.c.l.b16 %v480
        %v625 = vunpack.c.h.b16 %v480
        %v626 = vunpack.c.l.b16 %v481
        %v627 = vunpack.c.l.b16 %v482
        %v628 = vunpack.c.h.b16 %v482
        %v629 = vunpack.c.l.b16 %v483
        %v630 = vunpack.c.l.b16 %v484
        %v631 = vunpack.c.h.b16 %v484
        %v632 = vunpack.c.l.b16 %v485
        %v633 = vunpack.c.l.b16 %v486
        %v634 = vunpack.c.h.b16 %v486
        %v635 = vunpack.c.l.b16 %v487
        %v636 = vunpack.c.l.b16 %v488
        %v637 = vunpack.c.h.b16 %v488
        %v638 = vunpack.c.l.b16 %v489
        %v639 = vunpack.c.l.b16 %v490
        %v640 = vunpack.c.h.b16 %v490
        %v641 = vunpack.c.l.b16 %v491
        %v642 = vunpack.c.l.b16 %v492
        %v643 = vunpack.c.h.b16 %v492
        %v644 = vunpack.c.l.b16 %v493
        %v645 = vunpack.c.l.b16 %v494
        %v646 = vunpack.c.h.b16 %v494
        %v647 = vunpack.c.l.b16 %v495
        %v648 = vunpack.c.l.b16 %v496
        %v649 = vunpack.c.h.b16 %v496
        %v650 = vunpack.c.l.b16 %v497
        %v651 = vunpack.c.l.b16 %v498
        %v652 = vunpack.c.h.b16 %v498
        %v653 = vunpack.c.l.b16 %v499
        %v654 = vunpack.c.l.b16 %v500
        %v655 = vunpack.c.h.b16 %v500
        %v656 = vunpack.c.l.b16 %v501
        %v657 = vunpack.c.l.b16 %v502
        %v658 = vunpack.c.h.b16 %v502
        %v659 = vunpack.c.l.b16 %v503
        %v660 = vunpack.c.l.b16 %v504
        %v661 = vunpack.c.h.b16 %v504
        %v662 = vunpack.c.l.b16 %v505
        %v663 = vunpack.c.l.b16 %v506
        %v664 = vunpack.c.h.b16 %v506
        %v665 = vunpack.c.l.b16 %v507
        %v666 = vunpack.c.l.b16 %v508
        %v667 = vunpack.c.h.b16 %v508
        %v668 = vunpack.c.l.b16 %v509
        %v669 = vunpack.c.l.b16 %v510
        %v670 = vunpack.c.h.b16 %v510
        %v671 = vunpack.c.l.b16 %v511
        %v672 = vpack.c.b16 %v579, %v576
        %v673 = vpack.c.b16 %v580, %v577
        %v674 = vpack.c.b16 %v581, %v578
        %v675 = vpack.c.b16 %v585, %v582
        %v676 = vpack.c.b16 %v586, %v583
        %v677 = vpack.c.b16 %v587, %v584
        %v678 = vpack.c.b16 %v591, %v588
        %v679 = vpack.c.b16 %v592, %v589
        %v680 = vpack.c.b16 %v593, %v590
        %v681 = vpack.c.b16 %v597, %v594
        %v682 = vpack.c.b16 %v598, %v595
        %v683 = vpack.c.b16 %v599, %v596
        %v684 = vpack.c.b16 %v603, %v600
        %v685 = vpack.c.b16 %v604, %v601
        %v686 = vpack.c.b16 %v605, %v602
        %v687 = vpack.c.b16 %v609, %v606
        %v688 = vpack.c.b16 %v610, %v607
        %v689 = vpack.c.b16 %v611, %v608
        %v690 = vpack.c.b16 %v615, %v612
        %v691 = vpack.c.b16 %v616, %v613
        %v692 = vpack.c.b16 %v617, %v614
        %v693 = vpack.c.b16 %v621, %v618
        %v694 = vpack.c.b16 %v622, %v619
        %v695 = vpack.c.b16 %v623, %v620
        %v696 = vpack.c.b16 %v627, %v624
        %v697 = vpack.c.b16 %v628, %v625
        %v698 = vpack.c.b16 %v629, %v626
        %v699 = vpack.c.b16 %v633, %v630
        %v700 = vpack.c.b16 %v634, %v631
        %v701 = vpack.c.b16 %v635, %v632
        %v702 = vpack.c.b16 %v639, %v636
        %v703 = vpack.c.b16 %v640, %v637
        %v704 = vpack.c.b16 %v641, %v638
        %v705 = vpack.c.b16 %v645, %v642
        %v706 = vpack.c.b16 %v646, %v643
        %v707 = vpack.c.b16 %v647, %v644
        %v708 = vpack.c.b16 %v651, %v648
        %v709 = vpack.c.b16 %v652, %v649
        %v710 = vpack.c.b16 %v653, %v650
        %v711 = vpack.c.b16 %v657, %v654
        %v712 = vpack.c.b16 %v658, %v655
        %v713 = vpack.c.b16 %v659, %v656
        %v714 = vpack.c.b16 %v663, %v660
        %v715 = vpack.c.b16 %v664, %v661
        %v716 = vpack.c.b16 %v665, %v662
        %v717 = vpack.c.b16 %v669, %v666
        %v718 = vpack.c.b16 %v670, %v667
        %v719 = vpack.c.b16 %v671, %v668
        %768 = vmatprep.subr.bf16.mxu0 %v673
        %769 = vmatpush1.bf16.msra.mxu0 %v672
        %770 = vmatprep.subr.bf16.mxu0 %v676
        %771 = vmatpush1.bf16.msra.mxu0 %v675
        %772 = vmatprep.subr.bf16.mxu0 %v679
        %773 = vmatpush1.bf16.msra.mxu0 %v678
        %774 = vmatprep.subr.bf16.mxu0 %v682
        %775 = vmatpush1.bf16.msra.mxu0 %v681
        %776 = vmatprep.subr.bf16.mxu0 %v685
        %777 = vmatpush1.bf16.msra.mxu0 %v684
        %778 = vmatprep.subr.bf16.mxu0 %v688
        %779 = vmatpush1.bf16.msra.mxu0 %v687
        %780 = vmatprep.subr.bf16.mxu0 %v691
        %781 = vmatpush1.bf16.msra.mxu0 %v690
        %782 = vmatprep.subr.bf16.mxu0 %v694
        %783 = vmatpush1.bf16.msra.mxu0 %v693
        %784 = vmatprep.subr.bf16.mxu0 %v697
        %785 = vmatpush1.bf16.msra.mxu0 %v696
        %786 = vmatprep.subr.bf16.mxu0 %v700
        %787 = vmatpush1.bf16.msra.mxu0 %v699
        %788 = vmatprep.subr.bf16.mxu0 %v703
        %789 = vmatpush1.bf16.msra.mxu0 %v702
        %790 = vmatprep.subr.bf16.mxu0 %v706
        %791 = vmatpush1.bf16.msra.mxu0 %v705
        %792 = vmatprep.subr.bf16.mxu0 %v709
        %793 = vmatpush1.bf16.msra.mxu0 %v708
        %794 = vmatprep.subr.bf16.mxu0 %v712
        %795 = vmatpush1.bf16.msra.mxu0 %v711
        %796 = vmatprep.subr.bf16.mxu0 %v715
        %797 = vmatpush1.bf16.msra.mxu0 %v714
        %798 = vmatprep.subr.bf16.mxu0 %v718
        %799 = vmatpush1.bf16.msra.mxu0 %v717
        %800 = vmatprep.mubr.bf16.mxu0 %v447
        %801 = vmatmul.mubr.bf16.gmra.mrb[0].mxu0 %v446
        %v802 = vpop.f32.mrb[0].mxu0
        %v803 = vadd.f32 0.0, %v802
        %v804 = vpop.f32.mrb[0].mxu0
        %v805 = vadd.f32 0.0, %v804
        %v806 = vpop.f32.mrb[0].mxu0
        %v807 = vpop.f32.mrb[0].mxu0
        %808 = vdwg.mxu0
        %809 = vmatprep.subr.bf16.mxu0 0
        %810 = vmatpush1.bf16.msra.mxu0 %v674
        %811 = vmatprep.subr.bf16.mxu0 0
        %812 = vmatpush1.bf16.msra.mxu0 %v677
        %813 = vmatprep.subr.bf16.mxu0 0
        %814 = vmatpush1.bf16.msra.mxu0 %v680
        %815 = vmatprep.subr.bf16.mxu0 0
        %816 = vmatpush1.bf16.msra.mxu0 %v683
        %817 = vmatprep.subr.bf16.mxu0 0
        %818 = vmatpush1.bf16.msra.mxu0 %v686
        %819 = vmatprep.subr.bf16.mxu0 0
        %820 = vmatpush1.bf16.msra.mxu0 %v689
        %821 = vmatprep.subr.bf16.mxu0 0
        %822 = vmatpush1.bf16.msra.mxu0 %v692
        %823 = vmatprep.subr.bf16.mxu0 0
        %824 = vmatpush1.bf16.msra.mxu0 %v695
        %825 = vmatprep.subr.bf16.mxu0 0
        %826 = vmatpush1.bf16.msra.mxu0 %v698
        %827 = vmatprep.subr.bf16.mxu0 0
        %828 = vmatpush1.bf16.msra.mxu0 %v701
        %829 = vmatprep.subr.bf16.mxu0 0
        %830 = vmatpush1.bf16.msra.mxu0 %v704
        %831 = vmatprep.subr.bf16.mxu0 0
        %832 = vmatpush1.bf16.msra.mxu0 %v707
        %833 = vmatprep.subr.bf16.mxu0 0
        %834 = vmatpush1.bf16.msra.mxu0 %v710
        %835 = vmatprep.subr.bf16.mxu0 0
        %836 = vmatpush1.bf16.msra.mxu0 %v713
        %837 = vmatprep.subr.bf16.mxu0 0
        %838 = vmatpush1.bf16.msra.mxu0 %v716
        %839 = vmatprep.subr.bf16.mxu0 0
        %840 = vmatpush1.bf16.msra.mxu0 %v719
        %841 = vmatprep.mubr.bf16.mxu0 %v447
        %842 = vmatmul.mubr.bf16.gmra.mrb[0].mxu0 %v446
        %v843 = vpop.f32.mrb[0].mxu0
        %v844 = vadd.f32 0.0, %v843
        %v845 = vpop.f32.mrb[0].mxu0
        %v846 = vpop.f32.mrb[0].mxu0
        %v847 = vpop.f32.mrb[0].mxu0
        %848 = vdwg.mxu0
        %v849 = vrot.slane %v803, 7
        %v850 = vsel %vm343, %v849, 0.0
        %v851 = vadd.f32 %v850, %v805
        %v852 = vrot.slane %v844, 1
        %v853 = vsel %vm347, %v852, 0.0
        %v854 = vadd.f32 %v851, %v853
        %v855 = vld [vmem:[%s5] sm:$0x1]
        %v857 = vlaneseq
        %v858 = vshrl.u32 %v857, 7
        %v859 = vsub.s32 0, %v858
        %v860 = vrot.slane %v855, %v859
        %v862 = vadd.f32 %v854, %v860
        %v863 = vmax.f32 %v862, 0.0
        %v864 = vpack.c.bf16 %v863, %v863
        %865 = vst [vmem:[%s270] sm:$0xf] %v864
        %s866 = sand.u32 %s161, 1
        %s867 = scalar_lea.sflag [#allocation4], %s866
        %s868 = sand.u32 %s161, 1
        %s869 = smul.addr %s868, 4
        %s870 = scalar_lea.vmem [#allocation7], %s869
        // Predicated region
        $region53: #{tpu_custom_call.1} parent=43 // pred_check
          %p871 = pneg %p171
        $region54: #{tpu_custom_call.1} parent=43 // pred_check_branch
          %873 = sbr.rel (%p871) target = $region56
        $region55: #{tpu_custom_call.1} parent=43 // pred_region
          %s875 = ssub.s32 64, 64
          %876 = vsyncadd %s867, %s875
          %s877 = smul.addr %s22, 64
          %s878 = scalar_lea.hbm %s6, %s877
          %s880 = sshll.u32 %s870, 4
          %s881 = int_to_ptr.vmem [resolvable:$true] %s880
          %883 = dma.vmem_to_hbm [thread:$0]  %s881, 64, %s878, %s867
        $region56: #{tpu_custom_call.1} parent=43 // pred_fallthru
          _
      $region44: #{tpu_custom_call.1} parent=5 // pred_fallthru
        _
      %p884 = scmp.le.s32.totalorder 2, %s17
      // Predicated region
      $region57: #{tpu_custom_call.1} parent=5 // pred_check
        %p885 = pneg %p884
      $region58: #{tpu_custom_call.1} parent=5 // pred_check_branch
        %887 = sbr.rel (%p885) target = $region60
      $region59: #{tpu_custom_call.1} parent=5 // pred_region
        %s888 = ssub.s32 %s17, 2
        // Predicated region
        $region61: #{tpu_custom_call.1} parent=59 // pred_check
          %p889 = pneg %p177
        $region62: #{tpu_custom_call.1} parent=59 // pred_check_branch
          %891 = sbr.rel (%p889) target = $region64
        $region63: #{tpu_custom_call.1} parent=59 // pred_region
          %s892 = sand.u32 %s162, 1
          %s893 = scalar_lea.sflag [#allocation4], %s892
          %s894 = sand.u32 %s162, 1
          %s895 = smul.addr %s894, 4
          %s896 = scalar_lea.vmem [#allocation7], %s895
          %897 = dma.done %s893, 64
        $region64: #{tpu_custom_call.1} parent=59 // pred_fallthru
          _
      $region60: #{tpu_custom_call.1} parent=5 // pred_fallthru
        _
    $region6: #{tpu_custom_call.1} parent=1 // loop_footer
      %s21 = sadd.s32 1, %s17
    $region7: #{tpu_custom_call.1} parent=1 // loop_footer_branch
      %16 = sbr.rel target = $region3
    $region8: #{tpu_custom_call.1} parent=1 // loop_exit
      _
    %898 = vsyncpa [#allocation3], 1
    %s899 = scalar_lea.sflag [#allocation3], 1
    %900 = vsyncpa %s899, 1
    %901 = vsyncpa [#allocation6], 1
    %902 = vsyncpa [#allocation4], 1
    %s903 = scalar_lea.sflag [#allocation4], 1
    %904 = vsyncpa %s903, 1

</llo_original>
